<compile_context>
chip_gen: v7x
topology: tpu7x:2x2x1
jax: 0.10.0
libtpu: 0.0.40
codegen_flags: <defaults>
</compile_context>

<pallas_src>
import jax
import jax.numpy as jnp
import numpy as np
from jax.experimental import pallas as pl
from jax.experimental.pallas import tpu as pltpu


def _mlp_simclr_kernel(x_ref, w1_ref, b1_ref, w2_ref, b2_ref,
                       w3_ref, b3_ref, wfc_ref, bfc_ref, o_ref):
    """Feature-major fused MLP.

    x_ref : VMEM (in_dim, TILE_B)  -- batch on the lane axis.
    w*_ref: SMEM (out_f, in_f) weights, b*_ref: SMEM (out_f,) biases.
    o_ref : VMEM (out_dim, TILE_B) -- lane-dense output slab.
    """
    n_in = x_ref.shape[0]
    # One lane-dense (TILE_B,) vector per input feature (upcast matches x.float()).
    rows = [x_ref[k, :].astype(jnp.float32) for k in range(n_in)]

    def dense(w_ref, b_ref, in_rows, relu):
        n_out, n_inp = w_ref.shape
        outs = []
        for j in range(n_out):
            acc = w_ref[j, 0] * in_rows[0]
            for k in range(1, n_inp):
                acc = acc + w_ref[j, k] * in_rows[k]
            acc = acc + b_ref[j]
            if relu:
                acc = jnp.maximum(acc, 0.0)
            outs.append(acc)
        return outs

    h = dense(w1_ref, b1_ref, rows, True)    # fc1: in_dim -> 8, ReLU
    h = dense(w2_ref, b2_ref, h, True)       # fc2: 8 -> 4, ReLU
    h = dense(w3_ref, b3_ref, h, True)       # fc3: 4 -> 1, ReLU
    y = dense(wfc_ref, bfc_ref, h, False)    # projector fc (no activation)

    for j in range(len(y)):                  # one dense (TILE_B,) store per row
        o_ref[j, :] = y[j].astype(o_ref.dtype)


def mlp_simclr_tab(x, params, tile_b=512):
    """Fused MLPSimCLRTab forward.  x: (B, in_dim); params: PyTorch-shaped."""
    B, in_dim = x.shape
    out_dim = params["wfc"].shape[0]

    # Batch goes on the 128-lane axis: pad B up to a multiple of the tile.
    b128 = pl.cdiv(B, 128) * 128
    tile_b = min(tile_b, b128)
    b_pad = pl.cdiv(b128, tile_b) * tile_b
    grid = (b_pad // tile_b,)

    # Glue (plain JAX, outside the kernel): feature-major transpose + padding.
    xT = x.T                                   # (in_dim, B)
    if b_pad != B:
        xT = jnp.pad(xT, ((0, 0), (0, b_pad - B)))

    f32 = lambda a: jnp.asarray(a, jnp.float32)
    w1, b1 = f32(params["w1"]), f32(params["b1"])
    w2, b2 = f32(params["w2"]), f32(params["b2"])
    w3, b3 = f32(params["w3"]), f32(params["b3"])
    wfc, bfc = f32(params["wfc"]), f32(params["bfc"])

    smem = pl.BlockSpec(memory_space=pltpu.MemorySpace.SMEM)

    weight_bytes = sum(int(np.prod(a.shape)) * 4
                       for a in (w1, b1, w2, b2, w3, b3, wfc, bfc))
    flops = 2 * b_pad * (in_dim * 8 + 8 * 4 + 4 * 1 + out_dim * out_dim)
    bytes_accessed = (int(xT.size) * xT.dtype.itemsize
                      + b_pad * out_dim * 4 + weight_bytes)

    outT = pl.pallas_call(
        _mlp_simclr_kernel,
        out_shape=jax.ShapeDtypeStruct((out_dim, b_pad), jnp.float32),
        grid=grid,
        in_specs=[pl.BlockSpec((in_dim, tile_b), lambda i: (0, i)),
                  smem, smem, smem, smem, smem, smem, smem, smem],
        out_specs=pl.BlockSpec((out_dim, tile_b), lambda i: (0, i)),
        compiler_params=pltpu.CompilerParams(
            dimension_semantics=("parallel",)),
        cost_estimate=pl.CostEstimate(
            flops=flops, transcendentals=0, bytes_accessed=bytes_accessed),
    )(xT, w1, b1, w2, b2, w3, b3, wfc, bfc)

    return outT[:, :B].T                       # back to (B, out_dim)


def _init_params(key, in_dim=6, out_dim=1):
    """Deterministic init matching the PyTorch parameter shapes."""
    def linear(k, fan_in, fan_out):
        kw, kb = jax.random.split(k)
        bound = 1.0 / np.sqrt(fan_in)
        w = jax.random.uniform(kw, (fan_out, fan_in), jnp.float32, -bound, bound)
        b = jax.random.uniform(kb, (fan_out,), jnp.float32, -bound, bound)
        return w, b

    k1, k2, k3, k4 = jax.random.split(key, 4)
    w1, b1 = linear(k1, in_dim, 8)
    w2, b2 = linear(k2, 8, 4)
    w3, b3 = linear(k3, 4, 1)
    wfc, bfc = linear(k4, out_dim, out_dim)
    return dict(w1=w1, b1=b1, w2=w2, b2=b2, w3=w3, b3=b3, wfc=wfc, bfc=bfc)


def _reference(x, p):
    h = jnp.maximum(x.astype(jnp.float32) @ p["w1"].T + p["b1"], 0.0)
    h = jnp.maximum(h @ p["w2"].T + p["b2"], 0.0)
    h = jnp.maximum(h @ p["w3"].T + p["b3"], 0.0)
    return h @ p["wfc"].T + p["bfc"]


if __name__ == "__main__":
    key = jax.random.PRNGKey(0)
    k_x1, k_x2, k_p = jax.random.split(key, 3)

    IN_DIM, OUT_DIM = 6, 1   # backbone output dim is 1 -> projector must be 1x1
    params = _init_params(k_p, in_dim=IN_DIM, out_dim=OUT_DIM)

    # Small batch (single tile, padded to 128 lanes).
    x_small = jax.random.normal(k_x1, (8, IN_DIM), dtype=jnp.float32)
    out_small = jax.block_until_ready(mlp_simclr_tab(x_small, params))
    np.testing.assert_allclose(np.asarray(out_small),
                               np.asarray(_reference(x_small, params)),
                               rtol=1e-5, atol=1e-5)
    assert out_small.shape == (8, OUT_DIM) and out_small.dtype == jnp.float32

    # Larger batch exercising the multi-step batch grid + tail padding.
    x_big = jax.random.normal(k_x2, (700, IN_DIM), dtype=jnp.float32)
    out_big = jax.block_until_ready(mlp_simclr_tab(x_big, params))
    np.testing.assert_allclose(np.asarray(out_big),
                               np.asarray(_reference(x_big, params)),
                               rtol=1e-5, atol=1e-5)
    assert out_big.shape == (700, OUT_DIM) and out_big.dtype == jnp.float32

    print("KERNEL_OK")
</pallas_src>

<mosaic_0001>
module attributes {stable_mosaic.version = 11 : i64} {
  func.func @_mlp_simclr_kernel(%arg0: i32, %arg1: memref<6x128xf32, #tpu.memory_space<vmem>>, %arg2: memref<8x6xf32, #tpu.memory_space<smem>>, %arg3: memref<8xf32, #tpu.memory_space<smem>>, %arg4: memref<4x8xf32, #tpu.memory_space<smem>>, %arg5: memref<4xf32, #tpu.memory_space<smem>>, %arg6: memref<1x4xf32, #tpu.memory_space<smem>>, %arg7: memref<1xf32, #tpu.memory_space<smem>>, %arg8: memref<1x1xf32, #tpu.memory_space<smem>>, %arg9: memref<1xf32, #tpu.memory_space<smem>>, %arg10: memref<1x128xf32, #tpu.memory_space<vmem>>) attributes {dimension_semantics = [#tpu.dimension_semantics<parallel>], iteration_bounds = array<i64: 1>, scalar_prefetch = 0 : i64, scratch_operands = 0 : i64, tpu.core_type = #tpu.core_type<tc>, window_params = [{transform_indices = @transform_0, window_bounds = array<i64: 6, 128>}, {transform_indices = @transform_1, window_bounds = array<i64: 8, 6>}, {transform_indices = @transform_2, window_bounds = array<i64: 8>}, {transform_indices = @transform_3, window_bounds = array<i64: 4, 8>}, {transform_indices = @transform_4, window_bounds = array<i64: 4>}, {transform_indices = @transform_5, window_bounds = array<i64: 1, 4>}, {transform_indices = @transform_6, window_bounds = array<i64: 1>}, {transform_indices = @transform_7, window_bounds = array<i64: 1, 1>}, {transform_indices = @transform_8, window_bounds = array<i64: 1>}, {transform_indices = @transform_9, window_bounds = array<i64: 1, 128>}]} {
    %c0 = arith.constant 0 : index
    %c0_0 = arith.constant 0 : index
    %0 = vector.load %arg1[%c0, %c0_0] : memref<6x128xf32, #tpu.memory_space<vmem>>, vector<1x128xf32>
    %1 = vector.shape_cast %0 : vector<1x128xf32> to vector<128xf32>
    %c1 = arith.constant 1 : index
    %c0_1 = arith.constant 0 : index
    %2 = vector.load %arg1[%c1, %c0_1] : memref<6x128xf32, #tpu.memory_space<vmem>>, vector<1x128xf32>
    %3 = vector.shape_cast %2 : vector<1x128xf32> to vector<128xf32>
    %c2 = arith.constant 2 : index
    %c0_2 = arith.constant 0 : index
    %4 = vector.load %arg1[%c2, %c0_2] : memref<6x128xf32, #tpu.memory_space<vmem>>, vector<1x128xf32>
    %5 = vector.shape_cast %4 : vector<1x128xf32> to vector<128xf32>
    %c3 = arith.constant 3 : index
    %c0_3 = arith.constant 0 : index
    %6 = vector.load %arg1[%c3, %c0_3] : memref<6x128xf32, #tpu.memory_space<vmem>>, vector<1x128xf32>
    %7 = vector.shape_cast %6 : vector<1x128xf32> to vector<128xf32>
    %c4 = arith.constant 4 : index
    %c0_4 = arith.constant 0 : index
    %8 = vector.load %arg1[%c4, %c0_4] : memref<6x128xf32, #tpu.memory_space<vmem>>, vector<1x128xf32>
    %9 = vector.shape_cast %8 : vector<1x128xf32> to vector<128xf32>
    %c5 = arith.constant 5 : index
    %c0_5 = arith.constant 0 : index
    %10 = vector.load %arg1[%c5, %c0_5] : memref<6x128xf32, #tpu.memory_space<vmem>>, vector<1x128xf32>
    %11 = vector.shape_cast %10 : vector<1x128xf32> to vector<128xf32>
    %c0_6 = arith.constant 0 : index
    %c0_7 = arith.constant 0 : index
    %12 = memref.load %arg2[%c0_6, %c0_7] : memref<8x6xf32, #tpu.memory_space<smem>>
    %13 = vector.broadcast %12 : f32 to vector<128xf32>
    %14 = arith.mulf %13, %1 : vector<128xf32>
    %c0_8 = arith.constant 0 : index
    %c1_9 = arith.constant 1 : index
    %15 = memref.load %arg2[%c0_8, %c1_9] : memref<8x6xf32, #tpu.memory_space<smem>>
    %16 = vector.broadcast %15 : f32 to vector<128xf32>
    %17 = arith.mulf %16, %3 : vector<128xf32>
    %18 = arith.addf %14, %17 : vector<128xf32>
    %c0_10 = arith.constant 0 : index
    %c2_11 = arith.constant 2 : index
    %19 = memref.load %arg2[%c0_10, %c2_11] : memref<8x6xf32, #tpu.memory_space<smem>>
    %20 = vector.broadcast %19 : f32 to vector<128xf32>
    %21 = arith.mulf %20, %5 : vector<128xf32>
    %22 = arith.addf %18, %21 : vector<128xf32>
    %c0_12 = arith.constant 0 : index
    %c3_13 = arith.constant 3 : index
    %23 = memref.load %arg2[%c0_12, %c3_13] : memref<8x6xf32, #tpu.memory_space<smem>>
    %24 = vector.broadcast %23 : f32 to vector<128xf32>
    %25 = arith.mulf %24, %7 : vector<128xf32>
    %26 = arith.addf %22, %25 : vector<128xf32>
    %c0_14 = arith.constant 0 : index
    %c4_15 = arith.constant 4 : index
    %27 = memref.load %arg2[%c0_14, %c4_15] : memref<8x6xf32, #tpu.memory_space<smem>>
    %28 = vector.broadcast %27 : f32 to vector<128xf32>
    %29 = arith.mulf %28, %9 : vector<128xf32>
    %30 = arith.addf %26, %29 : vector<128xf32>
    %c0_16 = arith.constant 0 : index
    %c5_17 = arith.constant 5 : index
    %31 = memref.load %arg2[%c0_16, %c5_17] : memref<8x6xf32, #tpu.memory_space<smem>>
    %32 = vector.broadcast %31 : f32 to vector<128xf32>
    %33 = arith.mulf %32, %11 : vector<128xf32>
    %34 = arith.addf %30, %33 : vector<128xf32>
    %c0_18 = arith.constant 0 : index
    %35 = memref.load %arg3[%c0_18] : memref<8xf32, #tpu.memory_space<smem>>
    %36 = vector.broadcast %35 : f32 to vector<128xf32>
    %37 = arith.addf %34, %36 : vector<128xf32>
    %cst = arith.constant 0.000000e+00 : f32
    %38 = vector.broadcast %cst : f32 to vector<128xf32>
    %39 = arith.maximumf %37, %38 : vector<128xf32>
    %c1_19 = arith.constant 1 : index
    %c0_20 = arith.constant 0 : index
    %40 = memref.load %arg2[%c1_19, %c0_20] : memref<8x6xf32, #tpu.memory_space<smem>>
    %41 = vector.broadcast %40 : f32 to vector<128xf32>
    %42 = arith.mulf %41, %1 : vector<128xf32>
    %c1_21 = arith.constant 1 : index
    %c1_22 = arith.constant 1 : index
    %43 = memref.load %arg2[%c1_21, %c1_22] : memref<8x6xf32, #tpu.memory_space<smem>>
    %44 = vector.broadcast %43 : f32 to vector<128xf32>
    %45 = arith.mulf %44, %3 : vector<128xf32>
    %46 = arith.addf %42, %45 : vector<128xf32>
    %c1_23 = arith.constant 1 : index
    %c2_24 = arith.constant 2 : index
    %47 = memref.load %arg2[%c1_23, %c2_24] : memref<8x6xf32, #tpu.memory_space<smem>>
    %48 = vector.broadcast %47 : f32 to vector<128xf32>
    %49 = arith.mulf %48, %5 : vector<128xf32>
    %50 = arith.addf %46, %49 : vector<128xf32>
    %c1_25 = arith.constant 1 : index
    %c3_26 = arith.constant 3 : index
    %51 = memref.load %arg2[%c1_25, %c3_26] : memref<8x6xf32, #tpu.memory_space<smem>>
    %52 = vector.broadcast %51 : f32 to vector<128xf32>
    %53 = arith.mulf %52, %7 : vector<128xf32>
    %54 = arith.addf %50, %53 : vector<128xf32>
    %c1_27 = arith.constant 1 : index
    %c4_28 = arith.constant 4 : index
    %55 = memref.load %arg2[%c1_27, %c4_28] : memref<8x6xf32, #tpu.memory_space<smem>>
    %56 = vector.broadcast %55 : f32 to vector<128xf32>
    %57 = arith.mulf %56, %9 : vector<128xf32>
    %58 = arith.addf %54, %57 : vector<128xf32>
    %c1_29 = arith.constant 1 : index
    %c5_30 = arith.constant 5 : index
    %59 = memref.load %arg2[%c1_29, %c5_30] : memref<8x6xf32, #tpu.memory_space<smem>>
    %60 = vector.broadcast %59 : f32 to vector<128xf32>
    %61 = arith.mulf %60, %11 : vector<128xf32>
    %62 = arith.addf %58, %61 : vector<128xf32>
    %c1_31 = arith.constant 1 : index
    %63 = memref.load %arg3[%c1_31] : memref<8xf32, #tpu.memory_space<smem>>
    %64 = vector.broadcast %63 : f32 to vector<128xf32>
    %65 = arith.addf %62, %64 : vector<128xf32>
    %cst_32 = arith.constant 0.000000e+00 : f32
    %66 = vector.broadcast %cst_32 : f32 to vector<128xf32>
    %67 = arith.maximumf %65, %66 : vector<128xf32>
    %c2_33 = arith.constant 2 : index
    %c0_34 = arith.constant 0 : index
    %68 = memref.load %arg2[%c2_33, %c0_34] : memref<8x6xf32, #tpu.memory_space<smem>>
    %69 = vector.broadcast %68 : f32 to vector<128xf32>
    %70 = arith.mulf %69, %1 : vector<128xf32>
    %c2_35 = arith.constant 2 : index
    %c1_36 = arith.constant 1 : index
    %71 = memref.load %arg2[%c2_35, %c1_36] : memref<8x6xf32, #tpu.memory_space<smem>>
    %72 = vector.broadcast %71 : f32 to vector<128xf32>
    %73 = arith.mulf %72, %3 : vector<128xf32>
    %74 = arith.addf %70, %73 : vector<128xf32>
    %c2_37 = arith.constant 2 : index
    %c2_38 = arith.constant 2 : index
    %75 = memref.load %arg2[%c2_37, %c2_38] : memref<8x6xf32, #tpu.memory_space<smem>>
    %76 = vector.broadcast %75 : f32 to vector<128xf32>
    %77 = arith.mulf %76, %5 : vector<128xf32>
    %78 = arith.addf %74, %77 : vector<128xf32>
    %c2_39 = arith.constant 2 : index
    %c3_40 = arith.constant 3 : index
    %79 = memref.load %arg2[%c2_39, %c3_40] : memref<8x6xf32, #tpu.memory_space<smem>>
    %80 = vector.broadcast %79 : f32 to vector<128xf32>
    %81 = arith.mulf %80, %7 : vector<128xf32>
    %82 = arith.addf %78, %81 : vector<128xf32>
    %c2_41 = arith.constant 2 : index
    %c4_42 = arith.constant 4 : index
    %83 = memref.load %arg2[%c2_41, %c4_42] : memref<8x6xf32, #tpu.memory_space<smem>>
    %84 = vector.broadcast %83 : f32 to vector<128xf32>
    %85 = arith.mulf %84, %9 : vector<128xf32>
    %86 = arith.addf %82, %85 : vector<128xf32>
    %c2_43 = arith.constant 2 : index
    %c5_44 = arith.constant 5 : index
    %87 = memref.load %arg2[%c2_43, %c5_44] : memref<8x6xf32, #tpu.memory_space<smem>>
    %88 = vector.broadcast %87 : f32 to vector<128xf32>
    %89 = arith.mulf %88, %11 : vector<128xf32>
    %90 = arith.addf %86, %89 : vector<128xf32>
    %c2_45 = arith.constant 2 : index
    %91 = memref.load %arg3[%c2_45] : memref<8xf32, #tpu.memory_space<smem>>
    %92 = vector.broadcast %91 : f32 to vector<128xf32>
    %93 = arith.addf %90, %92 : vector<128xf32>
    %cst_46 = arith.constant 0.000000e+00 : f32
    %94 = vector.broadcast %cst_46 : f32 to vector<128xf32>
    %95 = arith.maximumf %93, %94 : vector<128xf32>
    %c3_47 = arith.constant 3 : index
    %c0_48 = arith.constant 0 : index
    %96 = memref.load %arg2[%c3_47, %c0_48] : memref<8x6xf32, #tpu.memory_space<smem>>
    %97 = vector.broadcast %96 : f32 to vector<128xf32>
    %98 = arith.mulf %97, %1 : vector<128xf32>
    %c3_49 = arith.constant 3 : index
    %c1_50 = arith.constant 1 : index
    %99 = memref.load %arg2[%c3_49, %c1_50] : memref<8x6xf32, #tpu.memory_space<smem>>
    %100 = vector.broadcast %99 : f32 to vector<128xf32>
    %101 = arith.mulf %100, %3 : vector<128xf32>
    %102 = arith.addf %98, %101 : vector<128xf32>
    %c3_51 = arith.constant 3 : index
    %c2_52 = arith.constant 2 : index
    %103 = memref.load %arg2[%c3_51, %c2_52] : memref<8x6xf32, #tpu.memory_space<smem>>
    %104 = vector.broadcast %103 : f32 to vector<128xf32>
    %105 = arith.mulf %104, %5 : vector<128xf32>
    %106 = arith.addf %102, %105 : vector<128xf32>
    %c3_53 = arith.constant 3 : index
    %c3_54 = arith.constant 3 : index
    %107 = memref.load %arg2[%c3_53, %c3_54] : memref<8x6xf32, #tpu.memory_space<smem>>
    %108 = vector.broadcast %107 : f32 to vector<128xf32>
    %109 = arith.mulf %108, %7 : vector<128xf32>
    %110 = arith.addf %106, %109 : vector<128xf32>
    %c3_55 = arith.constant 3 : index
    %c4_56 = arith.constant 4 : index
    %111 = memref.load %arg2[%c3_55, %c4_56] : memref<8x6xf32, #tpu.memory_space<smem>>
    %112 = vector.broadcast %111 : f32 to vector<128xf32>
    %113 = arith.mulf %112, %9 : vector<128xf32>
    %114 = arith.addf %110, %113 : vector<128xf32>
    %c3_57 = arith.constant 3 : index
    %c5_58 = arith.constant 5 : index
    %115 = memref.load %arg2[%c3_57, %c5_58] : memref<8x6xf32, #tpu.memory_space<smem>>
    %116 = vector.broadcast %115 : f32 to vector<128xf32>
    %117 = arith.mulf %116, %11 : vector<128xf32>
    %118 = arith.addf %114, %117 : vector<128xf32>
    %c3_59 = arith.constant 3 : index
    %119 = memref.load %arg3[%c3_59] : memref<8xf32, #tpu.memory_space<smem>>
    %120 = vector.broadcast %119 : f32 to vector<128xf32>
    %121 = arith.addf %118, %120 : vector<128xf32>
    %cst_60 = arith.constant 0.000000e+00 : f32
    %122 = vector.broadcast %cst_60 : f32 to vector<128xf32>
    %123 = arith.maximumf %121, %122 : vector<128xf32>
    %c4_61 = arith.constant 4 : index
    %c0_62 = arith.constant 0 : index
    %124 = memref.load %arg2[%c4_61, %c0_62] : memref<8x6xf32, #tpu.memory_space<smem>>
    %125 = vector.broadcast %124 : f32 to vector<128xf32>
    %126 = arith.mulf %125, %1 : vector<128xf32>
    %c4_63 = arith.constant 4 : index
    %c1_64 = arith.constant 1 : index
    %127 = memref.load %arg2[%c4_63, %c1_64] : memref<8x6xf32, #tpu.memory_space<smem>>
    %128 = vector.broadcast %127 : f32 to vector<128xf32>
    %129 = arith.mulf %128, %3 : vector<128xf32>
    %130 = arith.addf %126, %129 : vector<128xf32>
    %c4_65 = arith.constant 4 : index
    %c2_66 = arith.constant 2 : index
    %131 = memref.load %arg2[%c4_65, %c2_66] : memref<8x6xf32, #tpu.memory_space<smem>>
    %132 = vector.broadcast %131 : f32 to vector<128xf32>
    %133 = arith.mulf %132, %5 : vector<128xf32>
    %134 = arith.addf %130, %133 : vector<128xf32>
    %c4_67 = arith.constant 4 : index
    %c3_68 = arith.constant 3 : index
    %135 = memref.load %arg2[%c4_67, %c3_68] : memref<8x6xf32, #tpu.memory_space<smem>>
    %136 = vector.broadcast %135 : f32 to vector<128xf32>
    %137 = arith.mulf %136, %7 : vector<128xf32>
    %138 = arith.addf %134, %137 : vector<128xf32>
    %c4_69 = arith.constant 4 : index
    %c4_70 = arith.constant 4 : index
    %139 = memref.load %arg2[%c4_69, %c4_70] : memref<8x6xf32, #tpu.memory_space<smem>>
    %140 = vector.broadcast %139 : f32 to vector<128xf32>
    %141 = arith.mulf %140, %9 : vector<128xf32>
    %142 = arith.addf %138, %141 : vector<128xf32>
    %c4_71 = arith.constant 4 : index
    %c5_72 = arith.constant 5 : index
    %143 = memref.load %arg2[%c4_71, %c5_72] : memref<8x6xf32, #tpu.memory_space<smem>>
    %144 = vector.broadcast %143 : f32 to vector<128xf32>
    %145 = arith.mulf %144, %11 : vector<128xf32>
    %146 = arith.addf %142, %145 : vector<128xf32>
    %c4_73 = arith.constant 4 : index
    %147 = memref.load %arg3[%c4_73] : memref<8xf32, #tpu.memory_space<smem>>
    %148 = vector.broadcast %147 : f32 to vector<128xf32>
    %149 = arith.addf %146, %148 : vector<128xf32>
    %cst_74 = arith.constant 0.000000e+00 : f32
    %150 = vector.broadcast %cst_74 : f32 to vector<128xf32>
    %151 = arith.maximumf %149, %150 : vector<128xf32>
    %c5_75 = arith.constant 5 : index
    %c0_76 = arith.constant 0 : index
    %152 = memref.load %arg2[%c5_75, %c0_76] : memref<8x6xf32, #tpu.memory_space<smem>>
    %153 = vector.broadcast %152 : f32 to vector<128xf32>
    %154 = arith.mulf %153, %1 : vector<128xf32>
    %c5_77 = arith.constant 5 : index
    %c1_78 = arith.constant 1 : index
    %155 = memref.load %arg2[%c5_77, %c1_78] : memref<8x6xf32, #tpu.memory_space<smem>>
    %156 = vector.broadcast %155 : f32 to vector<128xf32>
    %157 = arith.mulf %156, %3 : vector<128xf32>
    %158 = arith.addf %154, %157 : vector<128xf32>
    %c5_79 = arith.constant 5 : index
    %c2_80 = arith.constant 2 : index
    %159 = memref.load %arg2[%c5_79, %c2_80] : memref<8x6xf32, #tpu.memory_space<smem>>
    %160 = vector.broadcast %159 : f32 to vector<128xf32>
    %161 = arith.mulf %160, %5 : vector<128xf32>
    %162 = arith.addf %158, %161 : vector<128xf32>
    %c5_81 = arith.constant 5 : index
    %c3_82 = arith.constant 3 : index
    %163 = memref.load %arg2[%c5_81, %c3_82] : memref<8x6xf32, #tpu.memory_space<smem>>
    %164 = vector.broadcast %163 : f32 to vector<128xf32>
    %165 = arith.mulf %164, %7 : vector<128xf32>
    %166 = arith.addf %162, %165 : vector<128xf32>
    %c5_83 = arith.constant 5 : index
    %c4_84 = arith.constant 4 : index
    %167 = memref.load %arg2[%c5_83, %c4_84] : memref<8x6xf32, #tpu.memory_space<smem>>
    %168 = vector.broadcast %167 : f32 to vector<128xf32>
    %169 = arith.mulf %168, %9 : vector<128xf32>
    %170 = arith.addf %166, %169 : vector<128xf32>
    %c5_85 = arith.constant 5 : index
    %c5_86 = arith.constant 5 : index
    %171 = memref.load %arg2[%c5_85, %c5_86] : memref<8x6xf32, #tpu.memory_space<smem>>
    %172 = vector.broadcast %171 : f32 to vector<128xf32>
    %173 = arith.mulf %172, %11 : vector<128xf32>
    %174 = arith.addf %170, %173 : vector<128xf32>
    %c5_87 = arith.constant 5 : index
    %175 = memref.load %arg3[%c5_87] : memref<8xf32, #tpu.memory_space<smem>>
    %176 = vector.broadcast %175 : f32 to vector<128xf32>
    %177 = arith.addf %174, %176 : vector<128xf32>
    %cst_88 = arith.constant 0.000000e+00 : f32
    %178 = vector.broadcast %cst_88 : f32 to vector<128xf32>
    %179 = arith.maximumf %177, %178 : vector<128xf32>
    %c6 = arith.constant 6 : index
    %c0_89 = arith.constant 0 : index
    %180 = memref.load %arg2[%c6, %c0_89] : memref<8x6xf32, #tpu.memory_space<smem>>
    %181 = vector.broadcast %180 : f32 to vector<128xf32>
    %182 = arith.mulf %181, %1 : vector<128xf32>
    %c6_90 = arith.constant 6 : index
    %c1_91 = arith.constant 1 : index
    %183 = memref.load %arg2[%c6_90, %c1_91] : memref<8x6xf32, #tpu.memory_space<smem>>
    %184 = vector.broadcast %183 : f32 to vector<128xf32>
    %185 = arith.mulf %184, %3 : vector<128xf32>
    %186 = arith.addf %182, %185 : vector<128xf32>
    %c6_92 = arith.constant 6 : index
    %c2_93 = arith.constant 2 : index
    %187 = memref.load %arg2[%c6_92, %c2_93] : memref<8x6xf32, #tpu.memory_space<smem>>
    %188 = vector.broadcast %187 : f32 to vector<128xf32>
    %189 = arith.mulf %188, %5 : vector<128xf32>
    %190 = arith.addf %186, %189 : vector<128xf32>
    %c6_94 = arith.constant 6 : index
    %c3_95 = arith.constant 3 : index
    %191 = memref.load %arg2[%c6_94, %c3_95] : memref<8x6xf32, #tpu.memory_space<smem>>
    %192 = vector.broadcast %191 : f32 to vector<128xf32>
    %193 = arith.mulf %192, %7 : vector<128xf32>
    %194 = arith.addf %190, %193 : vector<128xf32>
    %c6_96 = arith.constant 6 : index
    %c4_97 = arith.constant 4 : index
    %195 = memref.load %arg2[%c6_96, %c4_97] : memref<8x6xf32, #tpu.memory_space<smem>>
    %196 = vector.broadcast %195 : f32 to vector<128xf32>
    %197 = arith.mulf %196, %9 : vector<128xf32>
    %198 = arith.addf %194, %197 : vector<128xf32>
    %c6_98 = arith.constant 6 : index
    %c5_99 = arith.constant 5 : index
    %199 = memref.load %arg2[%c6_98, %c5_99] : memref<8x6xf32, #tpu.memory_space<smem>>
    %200 = vector.broadcast %199 : f32 to vector<128xf32>
    %201 = arith.mulf %200, %11 : vector<128xf32>
    %202 = arith.addf %198, %201 : vector<128xf32>
    %c6_100 = arith.constant 6 : index
    %203 = memref.load %arg3[%c6_100] : memref<8xf32, #tpu.memory_space<smem>>
    %204 = vector.broadcast %203 : f32 to vector<128xf32>
    %205 = arith.addf %202, %204 : vector<128xf32>
    %cst_101 = arith.constant 0.000000e+00 : f32
    %206 = vector.broadcast %cst_101 : f32 to vector<128xf32>
    %207 = arith.maximumf %205, %206 : vector<128xf32>
    %c7 = arith.constant 7 : index
    %c0_102 = arith.constant 0 : index
    %208 = memref.load %arg2[%c7, %c0_102] : memref<8x6xf32, #tpu.memory_space<smem>>
    %209 = vector.broadcast %208 : f32 to vector<128xf32>
    %210 = arith.mulf %209, %1 : vector<128xf32>
    %c7_103 = arith.constant 7 : index
    %c1_104 = arith.constant 1 : index
    %211 = memref.load %arg2[%c7_103, %c1_104] : memref<8x6xf32, #tpu.memory_space<smem>>
    %212 = vector.broadcast %211 : f32 to vector<128xf32>
    %213 = arith.mulf %212, %3 : vector<128xf32>
    %214 = arith.addf %210, %213 : vector<128xf32>
    %c7_105 = arith.constant 7 : index
    %c2_106 = arith.constant 2 : index
    %215 = memref.load %arg2[%c7_105, %c2_106] : memref<8x6xf32, #tpu.memory_space<smem>>
    %216 = vector.broadcast %215 : f32 to vector<128xf32>
    %217 = arith.mulf %216, %5 : vector<128xf32>
    %218 = arith.addf %214, %217 : vector<128xf32>
    %c7_107 = arith.constant 7 : index
    %c3_108 = arith.constant 3 : index
    %219 = memref.load %arg2[%c7_107, %c3_108] : memref<8x6xf32, #tpu.memory_space<smem>>
    %220 = vector.broadcast %219 : f32 to vector<128xf32>
    %221 = arith.mulf %220, %7 : vector<128xf32>
    %222 = arith.addf %218, %221 : vector<128xf32>
    %c7_109 = arith.constant 7 : index
    %c4_110 = arith.constant 4 : index
    %223 = memref.load %arg2[%c7_109, %c4_110] : memref<8x6xf32, #tpu.memory_space<smem>>
    %224 = vector.broadcast %223 : f32 to vector<128xf32>
    %225 = arith.mulf %224, %9 : vector<128xf32>
    %226 = arith.addf %222, %225 : vector<128xf32>
    %c7_111 = arith.constant 7 : index
    %c5_112 = arith.constant 5 : index
    %227 = memref.load %arg2[%c7_111, %c5_112] : memref<8x6xf32, #tpu.memory_space<smem>>
    %228 = vector.broadcast %227 : f32 to vector<128xf32>
    %229 = arith.mulf %228, %11 : vector<128xf32>
    %230 = arith.addf %226, %229 : vector<128xf32>
    %c7_113 = arith.constant 7 : index
    %231 = memref.load %arg3[%c7_113] : memref<8xf32, #tpu.memory_space<smem>>
    %232 = vector.broadcast %231 : f32 to vector<128xf32>
    %233 = arith.addf %230, %232 : vector<128xf32>
    %cst_114 = arith.constant 0.000000e+00 : f32
    %234 = vector.broadcast %cst_114 : f32 to vector<128xf32>
    %235 = arith.maximumf %233, %234 : vector<128xf32>
    %c0_115 = arith.constant 0 : index
    %c0_116 = arith.constant 0 : index
    %236 = memref.load %arg4[%c0_115, %c0_116] : memref<4x8xf32, #tpu.memory_space<smem>>
    %237 = vector.broadcast %236 : f32 to vector<128xf32>
    %238 = arith.mulf %237, %39 : vector<128xf32>
    %c0_117 = arith.constant 0 : index
    %c1_118 = arith.constant 1 : index
    %239 = memref.load %arg4[%c0_117, %c1_118] : memref<4x8xf32, #tpu.memory_space<smem>>
    %240 = vector.broadcast %239 : f32 to vector<128xf32>
    %241 = arith.mulf %240, %67 : vector<128xf32>
    %242 = arith.addf %238, %241 : vector<128xf32>
    %c0_119 = arith.constant 0 : index
    %c2_120 = arith.constant 2 : index
    %243 = memref.load %arg4[%c0_119, %c2_120] : memref<4x8xf32, #tpu.memory_space<smem>>
    %244 = vector.broadcast %243 : f32 to vector<128xf32>
    %245 = arith.mulf %244, %95 : vector<128xf32>
    %246 = arith.addf %242, %245 : vector<128xf32>
    %c0_121 = arith.constant 0 : index
    %c3_122 = arith.constant 3 : index
    %247 = memref.load %arg4[%c0_121, %c3_122] : memref<4x8xf32, #tpu.memory_space<smem>>
    %248 = vector.broadcast %247 : f32 to vector<128xf32>
    %249 = arith.mulf %248, %123 : vector<128xf32>
    %250 = arith.addf %246, %249 : vector<128xf32>
    %c0_123 = arith.constant 0 : index
    %c4_124 = arith.constant 4 : index
    %251 = memref.load %arg4[%c0_123, %c4_124] : memref<4x8xf32, #tpu.memory_space<smem>>
    %252 = vector.broadcast %251 : f32 to vector<128xf32>
    %253 = arith.mulf %252, %151 : vector<128xf32>
    %254 = arith.addf %250, %253 : vector<128xf32>
    %c0_125 = arith.constant 0 : index
    %c5_126 = arith.constant 5 : index
    %255 = memref.load %arg4[%c0_125, %c5_126] : memref<4x8xf32, #tpu.memory_space<smem>>
    %256 = vector.broadcast %255 : f32 to vector<128xf32>
    %257 = arith.mulf %256, %179 : vector<128xf32>
    %258 = arith.addf %254, %257 : vector<128xf32>
    %c0_127 = arith.constant 0 : index
    %c6_128 = arith.constant 6 : index
    %259 = memref.load %arg4[%c0_127, %c6_128] : memref<4x8xf32, #tpu.memory_space<smem>>
    %260 = vector.broadcast %259 : f32 to vector<128xf32>
    %261 = arith.mulf %260, %207 : vector<128xf32>
    %262 = arith.addf %258, %261 : vector<128xf32>
    %c0_129 = arith.constant 0 : index
    %c7_130 = arith.constant 7 : index
    %263 = memref.load %arg4[%c0_129, %c7_130] : memref<4x8xf32, #tpu.memory_space<smem>>
    %264 = vector.broadcast %263 : f32 to vector<128xf32>
    %265 = arith.mulf %264, %235 : vector<128xf32>
    %266 = arith.addf %262, %265 : vector<128xf32>
    %c0_131 = arith.constant 0 : index
    %267 = memref.load %arg5[%c0_131] : memref<4xf32, #tpu.memory_space<smem>>
    %268 = vector.broadcast %267 : f32 to vector<128xf32>
    %269 = arith.addf %266, %268 : vector<128xf32>
    %cst_132 = arith.constant 0.000000e+00 : f32
    %270 = vector.broadcast %cst_132 : f32 to vector<128xf32>
    %271 = arith.maximumf %269, %270 : vector<128xf32>
    %c1_133 = arith.constant 1 : index
    %c0_134 = arith.constant 0 : index
    %272 = memref.load %arg4[%c1_133, %c0_134] : memref<4x8xf32, #tpu.memory_space<smem>>
    %273 = vector.broadcast %272 : f32 to vector<128xf32>
    %274 = arith.mulf %273, %39 : vector<128xf32>
    %c1_135 = arith.constant 1 : index
    %c1_136 = arith.constant 1 : index
    %275 = memref.load %arg4[%c1_135, %c1_136] : memref<4x8xf32, #tpu.memory_space<smem>>
    %276 = vector.broadcast %275 : f32 to vector<128xf32>
    %277 = arith.mulf %276, %67 : vector<128xf32>
    %278 = arith.addf %274, %277 : vector<128xf32>
    %c1_137 = arith.constant 1 : index
    %c2_138 = arith.constant 2 : index
    %279 = memref.load %arg4[%c1_137, %c2_138] : memref<4x8xf32, #tpu.memory_space<smem>>
    %280 = vector.broadcast %279 : f32 to vector<128xf32>
    %281 = arith.mulf %280, %95 : vector<128xf32>
    %282 = arith.addf %278, %281 : vector<128xf32>
    %c1_139 = arith.constant 1 : index
    %c3_140 = arith.constant 3 : index
    %283 = memref.load %arg4[%c1_139, %c3_140] : memref<4x8xf32, #tpu.memory_space<smem>>
    %284 = vector.broadcast %283 : f32 to vector<128xf32>
    %285 = arith.mulf %284, %123 : vector<128xf32>
    %286 = arith.addf %282, %285 : vector<128xf32>
    %c1_141 = arith.constant 1 : index
    %c4_142 = arith.constant 4 : index
    %287 = memref.load %arg4[%c1_141, %c4_142] : memref<4x8xf32, #tpu.memory_space<smem>>
    %288 = vector.broadcast %287 : f32 to vector<128xf32>
    %289 = arith.mulf %288, %151 : vector<128xf32>
    %290 = arith.addf %286, %289 : vector<128xf32>
    %c1_143 = arith.constant 1 : index
    %c5_144 = arith.constant 5 : index
    %291 = memref.load %arg4[%c1_143, %c5_144] : memref<4x8xf32, #tpu.memory_space<smem>>
    %292 = vector.broadcast %291 : f32 to vector<128xf32>
    %293 = arith.mulf %292, %179 : vector<128xf32>
    %294 = arith.addf %290, %293 : vector<128xf32>
    %c1_145 = arith.constant 1 : index
    %c6_146 = arith.constant 6 : index
    %295 = memref.load %arg4[%c1_145, %c6_146] : memref<4x8xf32, #tpu.memory_space<smem>>
    %296 = vector.broadcast %295 : f32 to vector<128xf32>
    %297 = arith.mulf %296, %207 : vector<128xf32>
    %298 = arith.addf %294, %297 : vector<128xf32>
    %c1_147 = arith.constant 1 : index
    %c7_148 = arith.constant 7 : index
    %299 = memref.load %arg4[%c1_147, %c7_148] : memref<4x8xf32, #tpu.memory_space<smem>>
    %300 = vector.broadcast %299 : f32 to vector<128xf32>
    %301 = arith.mulf %300, %235 : vector<128xf32>
    %302 = arith.addf %298, %301 : vector<128xf32>
    %c1_149 = arith.constant 1 : index
    %303 = memref.load %arg5[%c1_149] : memref<4xf32, #tpu.memory_space<smem>>
    %304 = vector.broadcast %303 : f32 to vector<128xf32>
    %305 = arith.addf %302, %304 : vector<128xf32>
    %cst_150 = arith.constant 0.000000e+00 : f32
    %306 = vector.broadcast %cst_150 : f32 to vector<128xf32>
    %307 = arith.maximumf %305, %306 : vector<128xf32>
    %c2_151 = arith.constant 2 : index
    %c0_152 = arith.constant 0 : index
    %308 = memref.load %arg4[%c2_151, %c0_152] : memref<4x8xf32, #tpu.memory_space<smem>>
    %309 = vector.broadcast %308 : f32 to vector<128xf32>
    %310 = arith.mulf %309, %39 : vector<128xf32>
    %c2_153 = arith.constant 2 : index
    %c1_154 = arith.constant 1 : index
    %311 = memref.load %arg4[%c2_153, %c1_154] : memref<4x8xf32, #tpu.memory_space<smem>>
    %312 = vector.broadcast %311 : f32 to vector<128xf32>
    %313 = arith.mulf %312, %67 : vector<128xf32>
    %314 = arith.addf %310, %313 : vector<128xf32>
    %c2_155 = arith.constant 2 : index
    %c2_156 = arith.constant 2 : index
    %315 = memref.load %arg4[%c2_155, %c2_156] : memref<4x8xf32, #tpu.memory_space<smem>>
    %316 = vector.broadcast %315 : f32 to vector<128xf32>
    %317 = arith.mulf %316, %95 : vector<128xf32>
    %318 = arith.addf %314, %317 : vector<128xf32>
    %c2_157 = arith.constant 2 : index
    %c3_158 = arith.constant 3 : index
    %319 = memref.load %arg4[%c2_157, %c3_158] : memref<4x8xf32, #tpu.memory_space<smem>>
    %320 = vector.broadcast %319 : f32 to vector<128xf32>
    %321 = arith.mulf %320, %123 : vector<128xf32>
    %322 = arith.addf %318, %321 : vector<128xf32>
    %c2_159 = arith.constant 2 : index
    %c4_160 = arith.constant 4 : index
    %323 = memref.load %arg4[%c2_159, %c4_160] : memref<4x8xf32, #tpu.memory_space<smem>>
    %324 = vector.broadcast %323 : f32 to vector<128xf32>
    %325 = arith.mulf %324, %151 : vector<128xf32>
    %326 = arith.addf %322, %325 : vector<128xf32>
    %c2_161 = arith.constant 2 : index
    %c5_162 = arith.constant 5 : index
    %327 = memref.load %arg4[%c2_161, %c5_162] : memref<4x8xf32, #tpu.memory_space<smem>>
    %328 = vector.broadcast %327 : f32 to vector<128xf32>
    %329 = arith.mulf %328, %179 : vector<128xf32>
    %330 = arith.addf %326, %329 : vector<128xf32>
    %c2_163 = arith.constant 2 : index
    %c6_164 = arith.constant 6 : index
    %331 = memref.load %arg4[%c2_163, %c6_164] : memref<4x8xf32, #tpu.memory_space<smem>>
    %332 = vector.broadcast %331 : f32 to vector<128xf32>
    %333 = arith.mulf %332, %207 : vector<128xf32>
    %334 = arith.addf %330, %333 : vector<128xf32>
    %c2_165 = arith.constant 2 : index
    %c7_166 = arith.constant 7 : index
    %335 = memref.load %arg4[%c2_165, %c7_166] : memref<4x8xf32, #tpu.memory_space<smem>>
    %336 = vector.broadcast %335 : f32 to vector<128xf32>
    %337 = arith.mulf %336, %235 : vector<128xf32>
    %338 = arith.addf %334, %337 : vector<128xf32>
    %c2_167 = arith.constant 2 : index
    %339 = memref.load %arg5[%c2_167] : memref<4xf32, #tpu.memory_space<smem>>
    %340 = vector.broadcast %339 : f32 to vector<128xf32>
    %341 = arith.addf %338, %340 : vector<128xf32>
    %cst_168 = arith.constant 0.000000e+00 : f32
    %342 = vector.broadcast %cst_168 : f32 to vector<128xf32>
    %343 = arith.maximumf %341, %342 : vector<128xf32>
    %c3_169 = arith.constant 3 : index
    %c0_170 = arith.constant 0 : index
    %344 = memref.load %arg4[%c3_169, %c0_170] : memref<4x8xf32, #tpu.memory_space<smem>>
    %345 = vector.broadcast %344 : f32 to vector<128xf32>
    %346 = arith.mulf %345, %39 : vector<128xf32>
    %c3_171 = arith.constant 3 : index
    %c1_172 = arith.constant 1 : index
    %347 = memref.load %arg4[%c3_171, %c1_172] : memref<4x8xf32, #tpu.memory_space<smem>>
    %348 = vector.broadcast %347 : f32 to vector<128xf32>
    %349 = arith.mulf %348, %67 : vector<128xf32>
    %350 = arith.addf %346, %349 : vector<128xf32>
    %c3_173 = arith.constant 3 : index
    %c2_174 = arith.constant 2 : index
    %351 = memref.load %arg4[%c3_173, %c2_174] : memref<4x8xf32, #tpu.memory_space<smem>>
    %352 = vector.broadcast %351 : f32 to vector<128xf32>
    %353 = arith.mulf %352, %95 : vector<128xf32>
    %354 = arith.addf %350, %353 : vector<128xf32>
    %c3_175 = arith.constant 3 : index
    %c3_176 = arith.constant 3 : index
    %355 = memref.load %arg4[%c3_175, %c3_176] : memref<4x8xf32, #tpu.memory_space<smem>>
    %356 = vector.broadcast %355 : f32 to vector<128xf32>
    %357 = arith.mulf %356, %123 : vector<128xf32>
    %358 = arith.addf %354, %357 : vector<128xf32>
    %c3_177 = arith.constant 3 : index
    %c4_178 = arith.constant 4 : index
    %359 = memref.load %arg4[%c3_177, %c4_178] : memref<4x8xf32, #tpu.memory_space<smem>>
    %360 = vector.broadcast %359 : f32 to vector<128xf32>
    %361 = arith.mulf %360, %151 : vector<128xf32>
    %362 = arith.addf %358, %361 : vector<128xf32>
    %c3_179 = arith.constant 3 : index
    %c5_180 = arith.constant 5 : index
    %363 = memref.load %arg4[%c3_179, %c5_180] : memref<4x8xf32, #tpu.memory_space<smem>>
    %364 = vector.broadcast %363 : f32 to vector<128xf32>
    %365 = arith.mulf %364, %179 : vector<128xf32>
    %366 = arith.addf %362, %365 : vector<128xf32>
    %c3_181 = arith.constant 3 : index
    %c6_182 = arith.constant 6 : index
    %367 = memref.load %arg4[%c3_181, %c6_182] : memref<4x8xf32, #tpu.memory_space<smem>>
    %368 = vector.broadcast %367 : f32 to vector<128xf32>
    %369 = arith.mulf %368, %207 : vector<128xf32>
    %370 = arith.addf %366, %369 : vector<128xf32>
    %c3_183 = arith.constant 3 : index
    %c7_184 = arith.constant 7 : index
    %371 = memref.load %arg4[%c3_183, %c7_184] : memref<4x8xf32, #tpu.memory_space<smem>>
    %372 = vector.broadcast %371 : f32 to vector<128xf32>
    %373 = arith.mulf %372, %235 : vector<128xf32>
    %374 = arith.addf %370, %373 : vector<128xf32>
    %c3_185 = arith.constant 3 : index
    %375 = memref.load %arg5[%c3_185] : memref<4xf32, #tpu.memory_space<smem>>
    %376 = vector.broadcast %375 : f32 to vector<128xf32>
    %377 = arith.addf %374, %376 : vector<128xf32>
    %cst_186 = arith.constant 0.000000e+00 : f32
    %378 = vector.broadcast %cst_186 : f32 to vector<128xf32>
    %379 = arith.maximumf %377, %378 : vector<128xf32>
    %c0_187 = arith.constant 0 : index
    %c0_188 = arith.constant 0 : index
    %380 = memref.load %arg6[%c0_187, %c0_188] : memref<1x4xf32, #tpu.memory_space<smem>>
    %381 = vector.broadcast %380 : f32 to vector<128xf32>
    %382 = arith.mulf %381, %271 : vector<128xf32>
    %c0_189 = arith.constant 0 : index
    %c1_190 = arith.constant 1 : index
    %383 = memref.load %arg6[%c0_189, %c1_190] : memref<1x4xf32, #tpu.memory_space<smem>>
    %384 = vector.broadcast %383 : f32 to vector<128xf32>
    %385 = arith.mulf %384, %307 : vector<128xf32>
    %386 = arith.addf %382, %385 : vector<128xf32>
    %c0_191 = arith.constant 0 : index
    %c2_192 = arith.constant 2 : index
    %387 = memref.load %arg6[%c0_191, %c2_192] : memref<1x4xf32, #tpu.memory_space<smem>>
    %388 = vector.broadcast %387 : f32 to vector<128xf32>
    %389 = arith.mulf %388, %343 : vector<128xf32>
    %390 = arith.addf %386, %389 : vector<128xf32>
    %c0_193 = arith.constant 0 : index
    %c3_194 = arith.constant 3 : index
    %391 = memref.load %arg6[%c0_193, %c3_194] : memref<1x4xf32, #tpu.memory_space<smem>>
    %392 = vector.broadcast %391 : f32 to vector<128xf32>
    %393 = arith.mulf %392, %379 : vector<128xf32>
    %394 = arith.addf %390, %393 : vector<128xf32>
    %c0_195 = arith.constant 0 : index
    %395 = memref.load %arg7[%c0_195] : memref<1xf32, #tpu.memory_space<smem>>
    %396 = vector.broadcast %395 : f32 to vector<128xf32>
    %397 = arith.addf %394, %396 : vector<128xf32>
    %cst_196 = arith.constant 0.000000e+00 : f32
    %398 = vector.broadcast %cst_196 : f32 to vector<128xf32>
    %399 = arith.maximumf %397, %398 : vector<128xf32>
    %c0_197 = arith.constant 0 : index
    %c0_198 = arith.constant 0 : index
    %400 = memref.load %arg8[%c0_197, %c0_198] : memref<1x1xf32, #tpu.memory_space<smem>>
    %401 = vector.broadcast %400 : f32 to vector<128xf32>
    %402 = arith.mulf %401, %399 : vector<128xf32>
    %c0_199 = arith.constant 0 : index
    %403 = memref.load %arg9[%c0_199] : memref<1xf32, #tpu.memory_space<smem>>
    %404 = vector.broadcast %403 : f32 to vector<128xf32>
    %405 = arith.addf %402, %404 : vector<128xf32>
    %c0_200 = arith.constant 0 : index
    %c0_201 = arith.constant 0 : index
    %406 = vector.load %arg10[%c0_200, %c0_201] : memref<1x128xf32, #tpu.memory_space<vmem>>, vector<1x128xf32>
    %407 = vector.shape_cast %406 : vector<1x128xf32> to vector<128xf32>
    %408 = vector.shape_cast %405 : vector<128xf32> to vector<1x128xf32>
    tpu.vector_store %arg10[%c0_200, %c0_201], %408 {strides = array<i32>} : memref<1x128xf32, #tpu.memory_space<vmem>>, vector<1x128xf32>,
    return
  }
  func.func @transform_0(%arg0: i32) -> (i32, i32) {
    %c0_i32 = arith.constant 0 : i32
    %c0_i32_0 = arith.constant 0 : i32
    return %c0_i32, %arg0 : i32, i32
  }
  func.func @transform_1(%arg0: i32) -> (i32, i32) {
    %c0_i32 = arith.constant 0 : i32
    %c0_i32_0 = arith.constant 0 : i32
    %c0_i32_1 = arith.constant 0 : i32
    return %c0_i32, %c0_i32_0 : i32, i32
  }
  func.func @transform_2(%arg0: i32) -> i32 {
    %c0_i32 = arith.constant 0 : i32
    %c0_i32_0 = arith.constant 0 : i32
    return %c0_i32 : i32
  }
  func.func @transform_3(%arg0: i32) -> (i32, i32) {
    %c0_i32 = arith.constant 0 : i32
    %c0_i32_0 = arith.constant 0 : i32
    %c0_i32_1 = arith.constant 0 : i32
    return %c0_i32, %c0_i32_0 : i32, i32
  }
  func.func @transform_4(%arg0: i32) -> i32 {
    %c0_i32 = arith.constant 0 : i32
    %c0_i32_0 = arith.constant 0 : i32
    return %c0_i32 : i32
  }
  func.func @transform_5(%arg0: i32) -> (i32, i32) {
    %c0_i32 = arith.constant 0 : i32
    %c0_i32_0 = arith.constant 0 : i32
    %c0_i32_1 = arith.constant 0 : i32
    return %c0_i32, %c0_i32_0 : i32, i32
  }
  func.func @transform_6(%arg0: i32) -> i32 {
    %c0_i32 = arith.constant 0 : i32
    %c0_i32_0 = arith.constant 0 : i32
    return %c0_i32 : i32
  }
  func.func @transform_7(%arg0: i32) -> (i32, i32) {
    %c0_i32 = arith.constant 0 : i32
    %c0_i32_0 = arith.constant 0 : i32
    %c0_i32_1 = arith.constant 0 : i32
    return %c0_i32, %c0_i32_0 : i32, i32
  }
  func.func @transform_8(%arg0: i32) -> i32 {
    %c0_i32 = arith.constant 0 : i32
    %c0_i32_0 = arith.constant 0 : i32
    return %c0_i32 : i32
  }
  func.func @transform_9(%arg0: i32) -> (i32, i32) {
    %c0_i32 = arith.constant 0 : i32
    %c0_i32_0 = arith.constant 0 : i32
    return %c0_i32, %arg0 : i32, i32
  }
}

</mosaic_0001>

<llo_original>
// kernel: tpu_custom_call.1
$region0: #{tpu_custom_call.1}
  #allocation0 [shape = 'u32[]', space=smem, size = 0x4, offset = 0x4, fixed_abs, tag = 'smem constant byte address 0x4 - core index']
  #allocation1 [shape = 'u32[144,128]{1,0:T(1,128)}', space=vmem, size = 0x12000, scoped, tag = 'internal scratch']
  #allocation2 [shape = 'f32[1]{0:T(128)S(6)}', space=smem, size = 0x200, scoped, tag = 'scoped memory for tpu_custom_call.1']
  #allocation3 [shape = 'f32[1,1]{1,0:T(1,128)S(6)}', space=smem, size = 0x200, scoped, tag = 'scoped memory for tpu_custom_call.1']
  #allocation4 [shape = 'f32[1]{0:T(128)S(6)}', space=smem, size = 0x200, scoped, tag = 'scoped memory for tpu_custom_call.1']
  %s0 = inlined_call_operand.vmem [shape: f32[6,128], index: 0, kind: input, shape index: {}]
  %s1 = inlined_call_operand.hbm [shape: f32[8,6], index: 1, kind: input, shape index: {}]
  %s2 = inlined_call_operand.vmem [shape: f32[8], index: 2, kind: input, shape index: {}]
  %s3 = inlined_call_operand.vmem [shape: f32[4,8], index: 3, kind: input, shape index: {}]
  %s4 = inlined_call_operand.vmem [shape: f32[4], index: 4, kind: input, shape index: {}]
  %s5 = inlined_call_operand.vmem [shape: f32[1,4], index: 5, kind: input, shape index: {}]
  %s6 = inlined_call_operand.<no memory space> [shape: f32[1], index: 6, kind: input, shape index: {}]
  %s7 = inlined_call_operand.<no memory space> [shape: f32[1,1], index: 7, kind: input, shape index: {}]
  %s8 = inlined_call_operand.<no memory space> [shape: f32[1], index: 8, kind: input, shape index: {}]
  %s9 = inlined_call_operand.hbm [shape: f32[1,128], index: 9, kind: output, shape index: {}]
  %s10 = sld [smem:[#allocation0]]
  $region66: #{tpu_custom_call.1} parent=0
    _
  %s12 = ssub.s32 1, %s10
  %s13 = scalar_select 0, %s12, %s10
  %14 = sst [smem:[#allocation2]] %s6
  %15 = sst [smem:[#allocation3]] %s7
  %16 = sst [smem:[#allocation4]] %s8
  $region1: #{tpu_custom_call.1} parent=0
    #allocation5 [shape = 'u8[4096]{0}', space=smem, size = 0x1000, scoped, tag = 'input window, operand 1, single buffered']
    #allocation6 [shape = 's32[1]{0}', space=sflag, size = 0x4, scoped, tag = 'scoped memory for tpu_custom_call.1']
    #allocation7 [shape = 's32[1]{0}', space=sflag, size = 0x4, scoped, tag = 'scoped memory for tpu_custom_call.1']
    #allocation8 [shape = 's32[1]{0}', space=sflag, size = 0x4, scoped, tag = 'scoped memory for tpu_custom_call.1']
    #allocation9 [shape = 'u8[512]{0}', space=smem, size = 0x200, scoped, tag = 'input window, operand 2, single buffered']
    #allocation10 [shape = 'u8[2048]{0}', space=smem, size = 0x800, scoped, tag = 'input window, operand 3, single buffered']
    #allocation11 [shape = 's32[1]{0}', space=sflag, size = 0x4, scoped, tag = 'scoped memory for tpu_custom_call.1']
    #allocation12 [shape = 'u8[512]{0}', space=smem, size = 0x200, scoped, tag = 'input window, operand 4, single buffered']
    #allocation13 [shape = 'u8[512]{0}', space=smem, size = 0x200, scoped, tag = 'input window, operand 5, single buffered']
    #allocation14 [shape = 's32[1]{0}', space=sflag, size = 0x4, scoped, tag = 'scoped memory for tpu_custom_call.1']
    #allocation15 [shape = 'u8[512]{0}', space=vmem, size = 0x400, scoped, tag = 'output window, operand 0, single buffered']
    %17 = vsyncpa [#allocation7], 0
    %18 = vsyncpa [#allocation8], 0
    %19 = vsyncpa [#allocation11], 0
    %20 = vsyncpa [#allocation14], 0
    %21 = vsyncpa [#allocation6], 0
    // Predicated region
    $region2: #{tpu_custom_call.1} parent=1 // pred_check
      _
    $region3: #{tpu_custom_call.1} parent=1 // pred_check_branch
      %23 = sbr.rel (0) target = $region5
    $region4: #{tpu_custom_call.1} parent=1 // pred_region
      _
    $region5: #{tpu_custom_call.1} parent=1 // pred_fallthru
      _
    // Predicated region
    $region6: #{tpu_custom_call.1} parent=1 // pred_check
      _
    $region7: #{tpu_custom_call.1} parent=1 // pred_check_branch
      %25 = sbr.rel (0) target = $region9
    $region8: #{tpu_custom_call.1} parent=1 // pred_region
      %s27 = ssub.s32 128, 128
      %28 = vsyncadd [#allocation7], %s27
      %31 = dma.hbm_to_smem %s1, 128, [#allocation5], [#allocation7]
    $region9: #{tpu_custom_call.1} parent=1 // pred_fallthru
      _
    // Predicated region
    $region10: #{tpu_custom_call.1} parent=1 // pred_check
      _
    $region11: #{tpu_custom_call.1} parent=1 // pred_check_branch
      %33 = sbr.rel (0) target = $region13
    $region12: #{tpu_custom_call.1} parent=1 // pred_region
      %s35 = ssub.s32 16, 16
      %36 = vsyncadd [#allocation8], %s35
      %s38 = sshll.u32 %s2, 4
      %s39 = int_to_ptr.vmem [resolvable:$true] %s38
      %41 = dma.vmem_to_smem %s39, 16, [#allocation9], [#allocation8]
    $region13: #{tpu_custom_call.1} parent=1 // pred_fallthru
      _
    // Predicated region
    $region14: #{tpu_custom_call.1} parent=1 // pred_check
      _
    $region15: #{tpu_custom_call.1} parent=1 // pred_check_branch
      %43 = sbr.rel (0) target = $region17
    $region16: #{tpu_custom_call.1} parent=1 // pred_region
      %s45 = ssub.s32 64, 64
      %46 = vsyncadd [#allocation11], %s45
      %s48 = sshll.u32 %s3, 4
      %s49 = int_to_ptr.vmem [resolvable:$true] %s48
      %51 = dma.vmem_to_smem %s49, 64, [#allocation10], [#allocation11]
    $region17: #{tpu_custom_call.1} parent=1 // pred_fallthru
      _
    // Predicated region
    $region18: #{tpu_custom_call.1} parent=1 // pred_check
      _
    $region19: #{tpu_custom_call.1} parent=1 // pred_check_branch
      %53 = sbr.rel (0) target = $region21
    $region20: #{tpu_custom_call.1} parent=1 // pred_region
      %s55 = ssub.s32 16, 16
      %56 = vsyncadd [#allocation11], %s55
      %s58 = sshll.u32 %s4, 4
      %s59 = int_to_ptr.vmem [resolvable:$true] %s58
      %61 = dma.vmem_to_smem %s59, 16, [#allocation12], [#allocation11]
    $region21: #{tpu_custom_call.1} parent=1 // pred_fallthru
      _
    // Predicated region
    $region22: #{tpu_custom_call.1} parent=1 // pred_check
      _
    $region23: #{tpu_custom_call.1} parent=1 // pred_check_branch
      %63 = sbr.rel (0) target = $region25
    $region24: #{tpu_custom_call.1} parent=1 // pred_region
      %s65 = ssub.s32 16, 16
      %66 = vsyncadd [#allocation14], %s65
      %s68 = sshll.u32 %s5, 4
      %s69 = int_to_ptr.vmem [resolvable:$true] %s68
      %71 = dma.vmem_to_smem %s69, 16, [#allocation13], [#allocation14]
    $region25: #{tpu_custom_call.1} parent=1 // pred_fallthru
      _
    // Predicated region
    $region26: #{tpu_custom_call.1} parent=1 // pred_check
      _
    $region27: #{tpu_custom_call.1} parent=1 // pred_check_branch
      %73 = sbr.rel (0) target = $region29
    $region28: #{tpu_custom_call.1} parent=1 // pred_region
      _
    $region29: #{tpu_custom_call.1} parent=1 // pred_fallthru
      _
    // Predicated region
    $region30: #{tpu_custom_call.1} parent=1 // pred_check
      _
    $region31: #{tpu_custom_call.1} parent=1 // pred_check_branch
      %75 = sbr.rel (0) target = $region33
    $region32: #{tpu_custom_call.1} parent=1 // pred_region
      _
    $region33: #{tpu_custom_call.1} parent=1 // pred_fallthru
      _
    // Predicated region
    $region34: #{tpu_custom_call.1} parent=1 // pred_check
      _
    $region35: #{tpu_custom_call.1} parent=1 // pred_check_branch
      %77 = sbr.rel (0) target = $region37
    $region36: #{tpu_custom_call.1} parent=1 // pred_region
      _
    $region37: #{tpu_custom_call.1} parent=1 // pred_fallthru
      _
    // Predicated region
    $region38: #{tpu_custom_call.1} parent=1 // pred_check
      _
    $region39: #{tpu_custom_call.1} parent=1 // pred_check_branch
      %79 = sbr.rel (0) target = $region41
    $region40: #{tpu_custom_call.1} parent=1 // pred_region
      %80 = dma.done [#allocation7], 128
    $region41: #{tpu_custom_call.1} parent=1 // pred_fallthru
      _
    // Predicated region
    $region42: #{tpu_custom_call.1} parent=1 // pred_check
      _
    $region43: #{tpu_custom_call.1} parent=1 // pred_check_branch
      %82 = sbr.rel (0) target = $region45
    $region44: #{tpu_custom_call.1} parent=1 // pred_region
      %83 = dma.done [#allocation8], 16
    $region45: #{tpu_custom_call.1} parent=1 // pred_fallthru
      _
    // Predicated region
    $region46: #{tpu_custom_call.1} parent=1 // pred_check
      _
    $region47: #{tpu_custom_call.1} parent=1 // pred_check_branch
      %85 = sbr.rel (0) target = $region49
    $region48: #{tpu_custom_call.1} parent=1 // pred_region
      %86 = dma.done [#allocation11], 64
    $region49: #{tpu_custom_call.1} parent=1 // pred_fallthru
      _
    // Predicated region
    $region50: #{tpu_custom_call.1} parent=1 // pred_check
      _
    $region51: #{tpu_custom_call.1} parent=1 // pred_check_branch
      %88 = sbr.rel (0) target = $region53
    $region52: #{tpu_custom_call.1} parent=1 // pred_region
      %89 = dma.done [#allocation11], 16
    $region53: #{tpu_custom_call.1} parent=1 // pred_fallthru
      _
    // Predicated region
    $region54: #{tpu_custom_call.1} parent=1 // pred_check
      _
    $region55: #{tpu_custom_call.1} parent=1 // pred_check_branch
      %91 = sbr.rel (0) target = $region57
    $region56: #{tpu_custom_call.1} parent=1 // pred_region
      %92 = dma.done [#allocation14], 16
    $region57: #{tpu_custom_call.1} parent=1 // pred_fallthru
      _
    %93 = sfence
    %v94 = vld [vmem:[%s0] sm:$0x1]
    %v95 = vld [vmem:[%s0 + $0x1] sm:$0x1]
    %v96 = vld [vmem:[%s0 + $0x2] sm:$0x1]
    %v97 = vld [vmem:[%s0 + $0x3] sm:$0x1]
    %v98 = vld [vmem:[%s0 + $0x4] sm:$0x1]
    %v99 = vld [vmem:[%s0 + $0x5] sm:$0x1]
    %s100 = sld [smem:[#allocation5]]
    %v101 = vstv %s100
    %v102 = vmul.f32 %v101, %v94
    %s103 = sld [smem:[#allocation5 + $0x1]]
    %v104 = vstv %s103
    %v105 = vmul.f32 %v104, %v95
    %v106 = vadd.f32 %v102, %v105
    %s107 = sld [smem:[#allocation5 + $0x2]]
    %v108 = vstv %s107
    %v109 = vmul.f32 %v108, %v96
    %v110 = vadd.f32 %v106, %v109
    %s111 = sld [smem:[#allocation5 + $0x3]]
    %v112 = vstv %s111
    %v113 = vmul.f32 %v112, %v97
    %v114 = vadd.f32 %v110, %v113
    %s115 = sld [smem:[#allocation5 + $0x4]]
    %v116 = vstv %s115
    %v117 = vmul.f32 %v116, %v98
    %v118 = vadd.f32 %v114, %v117
    %s119 = sld [smem:[#allocation5 + $0x5]]
    %v120 = vstv %s119
    %v121 = vmul.f32 %v120, %v99
    %v122 = vadd.f32 %v118, %v121
    %s123 = sld [smem:[#allocation9]]
    %v124 = vstv %s123
    %v125 = vadd.f32 %v122, %v124
    %v126 = vmax.f32 %v125, 0.0
    %s127 = sld [smem:[#allocation5 + $0x80]]
    %v128 = vstv %s127
    %v129 = vmul.f32 %v128, %v94
    %s130 = sld [smem:[#allocation5 + $0x81]]
    %v131 = vstv %s130
    %v132 = vmul.f32 %v131, %v95
    %v133 = vadd.f32 %v129, %v132
    %s134 = sld [smem:[#allocation5 + $0x82]]
    %v135 = vstv %s134
    %v136 = vmul.f32 %v135, %v96
    %v137 = vadd.f32 %v133, %v136
    %s138 = sld [smem:[#allocation5 + $0x83]]
    %v139 = vstv %s138
    %v140 = vmul.f32 %v139, %v97
    %v141 = vadd.f32 %v137, %v140
    %s142 = sld [smem:[#allocation5 + $0x84]]
    %v143 = vstv %s142
    %v144 = vmul.f32 %v143, %v98
    %v145 = vadd.f32 %v141, %v144
    %s146 = sld [smem:[#allocation5 + $0x85]]
    %v147 = vstv %s146
    %v148 = vmul.f32 %v147, %v99
    %v149 = vadd.f32 %v145, %v148
    %s150 = sld [smem:[#allocation9 + $0x1]]
    %v151 = vstv %s150
    %v152 = vadd.f32 %v149, %v151
    %v153 = vmax.f32 %v152, 0.0
    %s154 = sld [smem:[#allocation5 + $0x100]]
    %v155 = vstv %s154
    %v156 = vmul.f32 %v155, %v94
    %s157 = sld [smem:[#allocation5 + $0x101]]
    %v158 = vstv %s157
    %v159 = vmul.f32 %v158, %v95
    %v160 = vadd.f32 %v156, %v159
    %s161 = sld [smem:[#allocation5 + $0x102]]
    %v162 = vstv %s161
    %v163 = vmul.f32 %v162, %v96
    %v164 = vadd.f32 %v160, %v163
    %s165 = sld [smem:[#allocation5 + $0x103]]
    %v166 = vstv %s165
    %v167 = vmul.f32 %v166, %v97
    %v168 = vadd.f32 %v164, %v167
    %s169 = sld [smem:[#allocation5 + $0x104]]
    %v170 = vstv %s169
    %v171 = vmul.f32 %v170, %v98
    %v172 = vadd.f32 %v168, %v171
    %s173 = sld [smem:[#allocation5 + $0x105]]
    %v174 = vstv %s173
    %v175 = vmul.f32 %v174, %v99
    %v176 = vadd.f32 %v172, %v175
    %s177 = sld [smem:[#allocation9 + $0x2]]
    %v178 = vstv %s177
    %v179 = vadd.f32 %v176, %v178
    %v180 = vmax.f32 %v179, 0.0
    %s181 = sld [smem:[#allocation5 + $0x180]]
    %v182 = vstv %s181
    %v183 = vmul.f32 %v182, %v94
    %s184 = sld [smem:[#allocation5 + $0x181]]
    %v185 = vstv %s184
    %v186 = vmul.f32 %v185, %v95
    %v187 = vadd.f32 %v183, %v186
    %s188 = sld [smem:[#allocation5 + $0x182]]
    %v189 = vstv %s188
    %v190 = vmul.f32 %v189, %v96
    %v191 = vadd.f32 %v187, %v190
    %s192 = sld [smem:[#allocation5 + $0x183]]
    %v193 = vstv %s192
    %v194 = vmul.f32 %v193, %v97
    %v195 = vadd.f32 %v191, %v194
    %s196 = sld [smem:[#allocation5 + $0x184]]
    %v197 = vstv %s196
    %v198 = vmul.f32 %v197, %v98
    %v199 = vadd.f32 %v195, %v198
    %s200 = sld [smem:[#allocation5 + $0x185]]
    %v201 = vstv %s200
    %v202 = vmul.f32 %v201, %v99
    %v203 = vadd.f32 %v199, %v202
    %s204 = sld [smem:[#allocation9 + $0x3]]
    %v205 = vstv %s204
    %v206 = vadd.f32 %v203, %v205
    %v207 = vmax.f32 %v206, 0.0
    %s208 = sld [smem:[#allocation5 + $0x200]]
    %v209 = vstv %s208
    %v210 = vmul.f32 %v209, %v94
    %s211 = sld [smem:[#allocation5 + $0x201]]
    %v212 = vstv %s211
    %v213 = vmul.f32 %v212, %v95
    %v214 = vadd.f32 %v210, %v213
    %s215 = sld [smem:[#allocation5 + $0x202]]
    %v216 = vstv %s215
    %v217 = vmul.f32 %v216, %v96
    %v218 = vadd.f32 %v214, %v217
    %s219 = sld [smem:[#allocation5 + $0x203]]
    %v220 = vstv %s219
    %v221 = vmul.f32 %v220, %v97
    %v222 = vadd.f32 %v218, %v221
    %s223 = sld [smem:[#allocation5 + $0x204]]
    %v224 = vstv %s223
    %v225 = vmul.f32 %v224, %v98
    %v226 = vadd.f32 %v222, %v225
    %s227 = sld [smem:[#allocation5 + $0x205]]
    %v228 = vstv %s227
    %v229 = vmul.f32 %v228, %v99
    %v230 = vadd.f32 %v226, %v229
    %s231 = sld [smem:[#allocation9 + $0x4]]
    %v232 = vstv %s231
    %v233 = vadd.f32 %v230, %v232
    %v234 = vmax.f32 %v233, 0.0
    %s235 = sld [smem:[#allocation5 + $0x280]]
    %v236 = vstv %s235
    %v237 = vmul.f32 %v236, %v94
    %s238 = sld [smem:[#allocation5 + $0x281]]
    %v239 = vstv %s238
    %v240 = vmul.f32 %v239, %v95
    %v241 = vadd.f32 %v237, %v240
    %s242 = sld [smem:[#allocation5 + $0x282]]
    %v243 = vstv %s242
    %v244 = vmul.f32 %v243, %v96
    %v245 = vadd.f32 %v241, %v244
    %s246 = sld [smem:[#allocation5 + $0x283]]
    %v247 = vstv %s246
    %v248 = vmul.f32 %v247, %v97
    %v249 = vadd.f32 %v245, %v248
    %s250 = sld [smem:[#allocation5 + $0x284]]
    %v251 = vstv %s250
    %v252 = vmul.f32 %v251, %v98
    %v253 = vadd.f32 %v249, %v252
    %s254 = sld [smem:[#allocation5 + $0x285]]
    %v255 = vstv %s254
    %v256 = vmul.f32 %v255, %v99
    %v257 = vadd.f32 %v253, %v256
    %s258 = sld [smem:[#allocation9 + $0x5]]
    %v259 = vstv %s258
    %v260 = vadd.f32 %v257, %v259
    %v261 = vmax.f32 %v260, 0.0
    %s262 = sld [smem:[#allocation5 + $0x300]]
    %v263 = vstv %s262
    %v264 = vmul.f32 %v263, %v94
    %s265 = sld [smem:[#allocation5 + $0x301]]
    %v266 = vstv %s265
    %v267 = vmul.f32 %v266, %v95
    %v268 = vadd.f32 %v264, %v267
    %s269 = sld [smem:[#allocation5 + $0x302]]
    %v270 = vstv %s269
    %v271 = vmul.f32 %v270, %v96
    %v272 = vadd.f32 %v268, %v271
    %s273 = sld [smem:[#allocation5 + $0x303]]
    %v274 = vstv %s273
    %v275 = vmul.f32 %v274, %v97
    %v276 = vadd.f32 %v272, %v275
    %s277 = sld [smem:[#allocation5 + $0x304]]
    %v278 = vstv %s277
    %v279 = vmul.f32 %v278, %v98
    %v280 = vadd.f32 %v276, %v279
    %s281 = sld [smem:[#allocation5 + $0x305]]
    %v282 = vstv %s281
    %v283 = vmul.f32 %v282, %v99
    %v284 = vadd.f32 %v280, %v283
    %s285 = sld [smem:[#allocation9 + $0x6]]
    %v286 = vstv %s285
    %v287 = vadd.f32 %v284, %v286
    %v288 = vmax.f32 %v287, 0.0
    %s289 = sld [smem:[#allocation5 + $0x380]]
    %v290 = vstv %s289
    %v291 = vmul.f32 %v290, %v94
    %s292 = sld [smem:[#allocation5 + $0x381]]
    %v293 = vstv %s292
    %v294 = vmul.f32 %v293, %v95
    %v295 = vadd.f32 %v291, %v294
    %s296 = sld [smem:[#allocation5 + $0x382]]
    %v297 = vstv %s296
    %v298 = vmul.f32 %v297, %v96
    %v299 = vadd.f32 %v295, %v298
    %s300 = sld [smem:[#allocation5 + $0x383]]
    %v301 = vstv %s300
    %v302 = vmul.f32 %v301, %v97
    %v303 = vadd.f32 %v299, %v302
    %s304 = sld [smem:[#allocation5 + $0x384]]
    %v305 = vstv %s304
    %v306 = vmul.f32 %v305, %v98
    %v307 = vadd.f32 %v303, %v306
    %s308 = sld [smem:[#allocation5 + $0x385]]
    %v309 = vstv %s308
    %v310 = vmul.f32 %v309, %v99
    %v311 = vadd.f32 %v307, %v310
    %s312 = sld [smem:[#allocation9 + $0x7]]
    %v313 = vstv %s312
    %v314 = vadd.f32 %v311, %v313
    %v315 = vmax.f32 %v314, 0.0
    %s316 = sld [smem:[#allocation10]]
    %v317 = vstv %s316
    %v318 = vmul.f32 %v317, %v126
    %s319 = sld [smem:[#allocation10 + $0x1]]
    %v320 = vstv %s319
    %v321 = vmul.f32 %v320, %v153
    %v322 = vadd.f32 %v318, %v321
    %s323 = sld [smem:[#allocation10 + $0x2]]
    %v324 = vstv %s323
    %v325 = vmul.f32 %v324, %v180
    %v326 = vadd.f32 %v322, %v325
    %s327 = sld [smem:[#allocation10 + $0x3]]
    %v328 = vstv %s327
    %v329 = vmul.f32 %v328, %v207
    %v330 = vadd.f32 %v326, %v329
    %s331 = sld [smem:[#allocation10 + $0x4]]
    %v332 = vstv %s331
    %v333 = vmul.f32 %v332, %v234
    %v334 = vadd.f32 %v330, %v333
    %s335 = sld [smem:[#allocation10 + $0x5]]
    %v336 = vstv %s335
    %v337 = vmul.f32 %v336, %v261
    %v338 = vadd.f32 %v334, %v337
    %s339 = sld [smem:[#allocation10 + $0x6]]
    %v340 = vstv %s339
    %v341 = vmul.f32 %v340, %v288
    %v342 = vadd.f32 %v338, %v341
    %s343 = sld [smem:[#allocation10 + $0x7]]
    %v344 = vstv %s343
    %v345 = vmul.f32 %v344, %v315
    %v346 = vadd.f32 %v342, %v345
    %s347 = sld [smem:[#allocation12]]
    %v348 = vstv %s347
    %v349 = vadd.f32 %v346, %v348
    %v350 = vmax.f32 %v349, 0.0
    %s351 = sld [smem:[#allocation10 + $0x80]]
    %v352 = vstv %s351
    %v353 = vmul.f32 %v352, %v126
    %s354 = sld [smem:[#allocation10 + $0x81]]
    %v355 = vstv %s354
    %v356 = vmul.f32 %v355, %v153
    %v357 = vadd.f32 %v353, %v356
    %s358 = sld [smem:[#allocation10 + $0x82]]
    %v359 = vstv %s358
    %v360 = vmul.f32 %v359, %v180
    %v361 = vadd.f32 %v357, %v360
    %s362 = sld [smem:[#allocation10 + $0x83]]
    %v363 = vstv %s362
    %v364 = vmul.f32 %v363, %v207
    %v365 = vadd.f32 %v361, %v364
    %s366 = sld [smem:[#allocation10 + $0x84]]
    %v367 = vstv %s366
    %v368 = vmul.f32 %v367, %v234
    %v369 = vadd.f32 %v365, %v368
    %s370 = sld [smem:[#allocation10 + $0x85]]
    %v371 = vstv %s370
    %v372 = vmul.f32 %v371, %v261
    %v373 = vadd.f32 %v369, %v372
    %s374 = sld [smem:[#allocation10 + $0x86]]
    %v375 = vstv %s374
    %v376 = vmul.f32 %v375, %v288
    %v377 = vadd.f32 %v373, %v376
    %s378 = sld [smem:[#allocation10 + $0x87]]
    %v379 = vstv %s378
    %v380 = vmul.f32 %v379, %v315
    %v381 = vadd.f32 %v377, %v380
    %s382 = sld [smem:[#allocation12 + $0x1]]
    %v383 = vstv %s382
    %v384 = vadd.f32 %v381, %v383
    %v385 = vmax.f32 %v384, 0.0
    %s386 = sld [smem:[#allocation10 + $0x100]]
    %v387 = vstv %s386
    %v388 = vmul.f32 %v387, %v126
    %s389 = sld [smem:[#allocation10 + $0x101]]
    %v390 = vstv %s389
    %v391 = vmul.f32 %v390, %v153
    %v392 = vadd.f32 %v388, %v391
    %s393 = sld [smem:[#allocation10 + $0x102]]
    %v394 = vstv %s393
    %v395 = vmul.f32 %v394, %v180
    %v396 = vadd.f32 %v392, %v395
    %s397 = sld [smem:[#allocation10 + $0x103]]
    %v398 = vstv %s397
    %v399 = vmul.f32 %v398, %v207
    %v400 = vadd.f32 %v396, %v399
    %s401 = sld [smem:[#allocation10 + $0x104]]
    %v402 = vstv %s401
    %v403 = vmul.f32 %v402, %v234
    %v404 = vadd.f32 %v400, %v403
    %s405 = sld [smem:[#allocation10 + $0x105]]
    %v406 = vstv %s405
    %v407 = vmul.f32 %v406, %v261
    %v408 = vadd.f32 %v404, %v407
    %s409 = sld [smem:[#allocation10 + $0x106]]
    %v410 = vstv %s409
    %v411 = vmul.f32 %v410, %v288
    %v412 = vadd.f32 %v408, %v411
    %s413 = sld [smem:[#allocation10 + $0x107]]
    %v414 = vstv %s413
    %v415 = vmul.f32 %v414, %v315
    %v416 = vadd.f32 %v412, %v415
    %s417 = sld [smem:[#allocation12 + $0x2]]
    %v418 = vstv %s417
    %v419 = vadd.f32 %v416, %v418
    %v420 = vmax.f32 %v419, 0.0
    %s421 = sld [smem:[#allocation10 + $0x180]]
    %v422 = vstv %s421
    %v423 = vmul.f32 %v422, %v126
    %s424 = sld [smem:[#allocation10 + $0x181]]
    %v425 = vstv %s424
    %v426 = vmul.f32 %v425, %v153
    %v427 = vadd.f32 %v423, %v426
    %s428 = sld [smem:[#allocation10 + $0x182]]
    %v429 = vstv %s428
    %v430 = vmul.f32 %v429, %v180
    %v431 = vadd.f32 %v427, %v430
    %s432 = sld [smem:[#allocation10 + $0x183]]
    %v433 = vstv %s432
    %v434 = vmul.f32 %v433, %v207
    %v435 = vadd.f32 %v431, %v434
    %s436 = sld [smem:[#allocation10 + $0x184]]
    %v437 = vstv %s436
    %v438 = vmul.f32 %v437, %v234
    %v439 = vadd.f32 %v435, %v438
    %s440 = sld [smem:[#allocation10 + $0x185]]
    %v441 = vstv %s440
    %v442 = vmul.f32 %v441, %v261
    %v443 = vadd.f32 %v439, %v442
    %s444 = sld [smem:[#allocation10 + $0x186]]
    %v445 = vstv %s444
    %v446 = vmul.f32 %v445, %v288
    %v447 = vadd.f32 %v443, %v446
    %s448 = sld [smem:[#allocation10 + $0x187]]
    %v449 = vstv %s448
    %v450 = vmul.f32 %v449, %v315
    %v451 = vadd.f32 %v447, %v450
    %s452 = sld [smem:[#allocation12 + $0x3]]
    %v453 = vstv %s452
    %v454 = vadd.f32 %v451, %v453
    %v455 = vmax.f32 %v454, 0.0
    %s456 = sld [smem:[#allocation13]]
    %v457 = vstv %s456
    %v458 = vmul.f32 %v457, %v350
    %s459 = sld [smem:[#allocation13 + $0x1]]
    %v460 = vstv %s459
    %v461 = vmul.f32 %v460, %v385
    %v462 = vadd.f32 %v458, %v461
    %s463 = sld [smem:[#allocation13 + $0x2]]
    %v464 = vstv %s463
    %v465 = vmul.f32 %v464, %v420
    %v466 = vadd.f32 %v462, %v465
    %s467 = sld [smem:[#allocation13 + $0x3]]
    %v468 = vstv %s467
    %v469 = vmul.f32 %v468, %v455
    %v470 = vadd.f32 %v466, %v469
    %s471 = sld [smem:[#allocation2]]
    %v472 = vstv %s471
    %v473 = vadd.f32 %v470, %v472
    %v474 = vmax.f32 %v473, 0.0
    %s475 = sld [smem:[#allocation3]]
    %v476 = vstv %s475
    %v477 = vmul.f32 %v476, %v474
    %s478 = sld [smem:[#allocation4]]
    %v479 = vstv %s478
    %v480 = vadd.f32 %v477, %v479
    %481 = vst [vmem:[#allocation15] sm:$0x1] %v480
    // Predicated region
    $region58: #{tpu_custom_call.1} parent=1 // pred_check
      _
    $region59: #{tpu_custom_call.1} parent=1 // pred_check_branch
      %483 = sbr.rel (0) target = $region61
    $region60: #{tpu_custom_call.1} parent=1 // pred_region
      %s485 = ssub.s32 16, 16
      %486 = vsyncadd [#allocation6], %s485
      %s488 = sshll.u32 [#allocation15], 4
      %s489 = int_to_ptr.vmem [resolvable:$true] %s488
      %491 = dma.vmem_to_hbm [thread:$0]  %s489, 16, %s9, [#allocation6]
    $region61: #{tpu_custom_call.1} parent=1 // pred_fallthru
      _
    // Predicated region
    $region62: #{tpu_custom_call.1} parent=1 // pred_check
      _
    $region63: #{tpu_custom_call.1} parent=1 // pred_check_branch
      %493 = sbr.rel (0) target = $region65
    $region64: #{tpu_custom_call.1} parent=1 // pred_region
      %494 = dma.done [#allocation6], 16
    $region65: #{tpu_custom_call.1} parent=1 // pred_fallthru
      _
    %495 = vsyncpa [#allocation6], 1
    %496 = vsyncpa [#allocation7], 1
    %497 = vsyncpa [#allocation8], 1
    %498 = vsyncpa [#allocation11], 1
    %499 = vsyncpa [#allocation14], 1

</llo_original>
